<compile_context>
chip_gen: v6e
topology: v6e:2x2x1
jax: 0.10.0
libtpu: 0.0.40
codegen_flags: <defaults>
</compile_context>

<pallas_src>
import math
import jax
import jax.numpy as jnp
from jax.experimental import pallas as pl
from jax.experimental.pallas import tpu as pltpu

INPUT_SIZE = 125
HIDDEN_SIZE = 64
OUTPUT_SIZE = 10
OUT_PAD = 16          # fc5 output padded 10 -> 16 lanes (cheap, dense-ish store)


def _round_up(n, m):
    return ((n + m - 1) // m) * m


def _cdiv(a, b):
    return -(-a // b)


# --------------------------------------------------------------------------
# Kernel
# --------------------------------------------------------------------------
def ffn_kernel(x_ref, w1_ref, wmid_ref, w5_ref, b14_ref, b5_ref, o_ref):
    """Fused 5-layer MLP: h_{k+1} = relu(h_k @ W_k + b_k), k = 1..5.

    Matmuls run on the MXU in bf16 with f32 accumulation
    (preferred_element_type=f32); bias-add / ReLU epilogues stay in f32 on
    the VPU.  The bf16 cast of the streamed f32 input happens here, in-kernel.
    """
    b14 = b14_ref[...]                                    # (4, 64) f32
    h = x_ref[...].astype(jnp.bfloat16)                   # (tile, 125) bf16

    # fc1 + relu1  (K = 125; Mosaic pads/masks K internally)
    acc = jnp.dot(h, w1_ref[...], preferred_element_type=jnp.float32)
    acc = jnp.maximum(acc + b14[0:1, :], 0.0)
    h = acc.astype(jnp.bfloat16)

    # fc2..fc4 + relu2..relu4 (statically unrolled)
    for l in range(3):
        acc = jnp.dot(h, wmid_ref[l], preferred_element_type=jnp.float32)
        acc = jnp.maximum(acc + b14[l + 1:l + 2, :], 0.0)
        h = acc.astype(jnp.bfloat16)

    # fc5 + relu5 (the PyTorch module applies ReLU on the output layer too)
    acc = jnp.dot(h, w5_ref[...], preferred_element_type=jnp.float32)
    acc = jnp.maximum(acc + b5_ref[...], 0.0)
    o_ref[...] = acc.astype(o_ref.dtype)                  # (tile, 16) f32


# --------------------------------------------------------------------------
# Parameter prep (run ONCE, outside the per-call path)
# --------------------------------------------------------------------------
def prepare_ffn_params(params):
    """params: 5 pairs (W[in, out] f32, b[1, out] f32) -> prepared tuple."""
    (w1, b1), (w2, b2), (w3, b3), (w4, b4), (w5, b5) = params
    w1_bf = w1.astype(jnp.bfloat16)                               # (125, 64)
    w_mid = jnp.stack([w2, w3, w4]).astype(jnp.bfloat16)          # (3, 64, 64)
    w5_bf = jnp.pad(w5, ((0, 0), (0, OUT_PAD - OUTPUT_SIZE))
                    ).astype(jnp.bfloat16)                        # (64, 16)
    b14 = jnp.concatenate([b1, b2, b3, b4], axis=0)               # (4, 64) f32
    b5_p = jnp.pad(b5, ((0, 0), (0, OUT_PAD - OUTPUT_SIZE)))      # (1, 16) f32
    return (w1_bf, w_mid, w5_bf, b14, b5_p)


# --------------------------------------------------------------------------
# Forward wrapper
# --------------------------------------------------------------------------
def ffn_forward(x, prepared_params, *, tile_b=1024):
    """x: (B, 125) f32.  prepared_params: output of prepare_ffn_params.

    Returns (B, 10) float32.
    """
    B, D = x.shape
    assert D == INPUT_SIZE
    w1_bf, w_mid, w5_bf, b14, b5_p = prepared_params

    # ---- batch tiling: big MXU-filling tiles, multiple of 16 sublanes,
    #      and >= 2 grid steps when B allows (v7x megacore sharding) ----
    B16 = _round_up(B, 16)
    tile = min(int(tile_b), _round_up(_cdiv(B16, 2), 16))
    tile = max(16, _round_up(tile, 16))
    B_pad = _round_up(B, tile)
    grid = (B_pad // tile,)

    # Only a (rare) batch pad; no dtype cast / feature pad pre-pass on x.
    x_in = x if B_pad == B else jnp.pad(x, ((0, B_pad - B), (0, 0)))

    in_specs = [
        pl.BlockSpec((tile, INPUT_SIZE), lambda i: (i, 0)),              # x f32
        pl.BlockSpec((INPUT_SIZE, HIDDEN_SIZE), lambda i: (0, 0)),       # w1
        pl.BlockSpec((3, HIDDEN_SIZE, HIDDEN_SIZE), lambda i: (0, 0, 0)),# w2..4
        pl.BlockSpec((HIDDEN_SIZE, OUT_PAD), lambda i: (0, 0)),          # w5
        pl.BlockSpec((4, HIDDEN_SIZE), lambda i: (0, 0)),                # b1..4
        pl.BlockSpec((1, OUT_PAD), lambda i: (0, 0)),                    # b5
    ]
    out_spec = pl.BlockSpec((tile, OUT_PAD), lambda i: (i, 0))

    # Advisory cost estimate so XLA schedules the custom call sensibly.
    flops = 2 * B_pad * (INPUT_SIZE * HIDDEN_SIZE
                         + 3 * HIDDEN_SIZE * HIDDEN_SIZE
                         + HIDDEN_SIZE * OUT_PAD)
    param_bytes = sum(int(a.size) * a.dtype.itemsize
                      for a in (w1_bf, w_mid, w5_bf, b14, b5_p))
    bytes_accessed = B_pad * INPUT_SIZE * 4 + B_pad * OUT_PAD * 4 + param_bytes
    cost = pl.CostEstimate(flops=flops, transcendentals=0,
                           bytes_accessed=bytes_accessed)

    out_padded = pl.pallas_call(
        ffn_kernel,
        out_shape=jax.ShapeDtypeStruct((B_pad, OUT_PAD), jnp.float32),
        grid_spec=pltpu.PrefetchScalarGridSpec(
            num_scalar_prefetch=0,
            grid=grid,
            in_specs=in_specs,
            out_specs=out_spec,
        ),
        compiler_params=pltpu.CompilerParams(
            dimension_semantics=("parallel",)),
        cost_estimate=cost,
    )(x_in, w1_bf, w_mid, w5_bf, b14, b5_p)

    return out_padded[:B, :OUTPUT_SIZE]


# --------------------------------------------------------------------------
# Init + references
# --------------------------------------------------------------------------
def xavier_uniform(key, fan_in, fan_out):
    """Matches torch.nn.init.xavier_uniform_ (gain=1). Stored as [in, out]."""
    limit = math.sqrt(6.0 / (fan_in + fan_out))
    return jax.random.uniform(key, (fan_in, fan_out), jnp.float32,
                              minval=-limit, maxval=limit)


def make_params(key):
    dims = [(INPUT_SIZE, HIDDEN_SIZE),
            (HIDDEN_SIZE, HIDDEN_SIZE),
            (HIDDEN_SIZE, HIDDEN_SIZE),
            (HIDDEN_SIZE, HIDDEN_SIZE),
            (HIDDEN_SIZE, OUTPUT_SIZE)]
    keys = jax.random.split(key, len(dims))
    params = []
    for k, (din, dout) in zip(keys, dims):
        params.append((xavier_uniform(k, din, dout),         # y = x @ W + b
                       jnp.zeros((1, dout), jnp.float32)))   # zero bias (2D)
    return params


def ffn_reference_f32(x, params):
    """Pure f32 reference that mirrors the PyTorch forward(): 5x (fc + ReLU)."""
    h = x
    for w, b in params:
        h = jnp.maximum(jnp.dot(h, w) + b, 0.0)
    return h


def ffn_reference_bf16(x, params):
    """Reference mirroring the kernel's bf16-input / f32-accumulate math."""
    h = x.astype(jnp.bfloat16)
    acc = None
    for w, b in params:
        acc = jnp.dot(h, w.astype(jnp.bfloat16),
                      preferred_element_type=jnp.float32)
        acc = jnp.maximum(acc + b, 0.0)
        h = acc.astype(jnp.bfloat16)
    return acc


# --------------------------------------------------------------------------
if __name__ == "__main__":
    key = jax.random.PRNGKey(0)
    pkey, xkey = jax.random.split(key)
    params = make_params(pkey)
    prepared = prepare_ffn_params(params)     # pad/stack/cast once, not per call

    B = 16  # small demo batch; ragged / large batches also supported
    x = jax.random.normal(xkey, (B, INPUT_SIZE), jnp.float32)

    out = ffn_forward(x, prepared)
    out = jax.block_until_ready(out)
    assert out.shape == (B, OUTPUT_SIZE)

    # Implementation check: against a reference using the same bf16 matmul path.
    ref_bf16 = ffn_reference_bf16(x, params)
    assert jnp.allclose(out, ref_bf16, atol=2e-2, rtol=2e-2), \
        float(jnp.max(jnp.abs(out - ref_bf16)))

    # Semantics check: against the true f32 PyTorch-style forward (loose tol,
    # since the kernel runs bf16 matmuls with f32 accumulation).
    ref_f32 = ffn_reference_f32(x, params)
    assert jnp.allclose(out, ref_f32, atol=1e-1, rtol=1e-1), \
        float(jnp.max(jnp.abs(out - ref_f32)))

    print("KERNEL_OK")
</pallas_src>

<mosaic_0001>
module attributes {stable_mosaic.version = 11 : i64} {
  func.func @ffn_kernel(%arg0: i32, %arg1: memref<16x125xf32, #tpu.memory_space<vmem>>, %arg2: memref<125x64xbf16, #tpu.memory_space<vmem>>, %arg3: memref<3x64x64xbf16, #tpu.memory_space<vmem>>, %arg4: memref<64x16xbf16, #tpu.memory_space<vmem>>, %arg5: memref<4x64xf32, #tpu.memory_space<vmem>>, %arg6: memref<1x16xf32, #tpu.memory_space<vmem>>, %arg7: memref<16x16xf32, #tpu.memory_space<vmem>>) attributes {dimension_semantics = [#tpu.dimension_semantics<parallel>], iteration_bounds = array<i64: 1>, scalar_prefetch = 0 : i64, scratch_operands = 0 : i64, tpu.core_type = #tpu.core_type<tc>, window_params = [{transform_indices = @transform_0, window_bounds = array<i64: 16, 125>}, {pipeline_mode = #tpu.pipeline_mode<synchronous>, transform_indices = @transform_1, window_bounds = array<i64: 125, 64>}, {pipeline_mode = #tpu.pipeline_mode<synchronous>, transform_indices = @transform_2, window_bounds = array<i64: 3, 64, 64>}, {pipeline_mode = #tpu.pipeline_mode<synchronous>, transform_indices = @transform_3, window_bounds = array<i64: 64, 16>}, {pipeline_mode = #tpu.pipeline_mode<synchronous>, transform_indices = @transform_4, window_bounds = array<i64: 4, 64>}, {pipeline_mode = #tpu.pipeline_mode<synchronous>, transform_indices = @transform_5, window_bounds = array<i64: 1, 16>}, {transform_indices = @transform_6, window_bounds = array<i64: 16, 16>}]} {
    %c0 = arith.constant 0 : index
    %c0_0 = arith.constant 0 : index
    %0 = vector.load %arg5[%c0, %c0_0] : memref<4x64xf32, #tpu.memory_space<vmem>>, vector<4x64xf32>
    %c0_1 = arith.constant 0 : index
    %c0_2 = arith.constant 0 : index
    %1 = vector.load %arg1[%c0_1, %c0_2] : memref<16x125xf32, #tpu.memory_space<vmem>>, vector<16x125xf32>
    %2 = arith.truncf %1 : vector<16x125xf32> to vector<16x125xbf16>
    %c0_3 = arith.constant 0 : index
    %c0_4 = arith.constant 0 : index
    %3 = vector.load %arg2[%c0_3, %c0_4] : memref<125x64xbf16, #tpu.memory_space<vmem>>, vector<125x64xbf16>
    %cst = arith.constant dense<0.000000e+00> : vector<16x64xf32>
    %4 = tpu.matmul %2, %3, %cst {dimension_numbers = #tpu.dot_dimension_numbers<[1], [0], [0], [1], [0, 0, 1, 1], [], []>} : vector<16x125xbf16>, vector<125x64xbf16>, vector<16x64xf32> -> vector<16x64xf32>
    %5 = vector.extract_strided_slice %0 {offsets = [0, 0], sizes = [1, 64], strides = [1, 1]} : vector<4x64xf32> to vector<1x64xf32>
    %6 = vector.broadcast %5 : vector<1x64xf32> to vector<16x64xf32>
    %7 = arith.addf %4, %6 : vector<16x64xf32>
    %cst_5 = arith.constant 0.000000e+00 : f32
    %8 = vector.broadcast %cst_5 : f32 to vector<16x64xf32>
    %9 = arith.maximumf %7, %8 : vector<16x64xf32>
    %10 = arith.truncf %9 : vector<16x64xf32> to vector<16x64xbf16>
    %c0_6 = arith.constant 0 : index
    %c0_7 = arith.constant 0 : index
    %c0_8 = arith.constant 0 : index
    %11 = vector.load %arg3[%c0_6, %c0_7, %c0_8] : memref<3x64x64xbf16, #tpu.memory_space<vmem>>, vector<1x64x64xbf16>
    %12 = vector.shape_cast %11 : vector<1x64x64xbf16> to vector<64x64xbf16>
    %cst_9 = arith.constant dense<0.000000e+00> : vector<16x64xf32>
    %13 = tpu.matmul %10, %12, %cst_9 {dimension_numbers = #tpu.dot_dimension_numbers<[1], [0], [0], [1], [0, 0, 1, 1], [], []>} : vector<16x64xbf16>, vector<64x64xbf16>, vector<16x64xf32> -> vector<16x64xf32>
    %14 = vector.extract_strided_slice %0 {offsets = [1, 0], sizes = [1, 64], strides = [1, 1]} : vector<4x64xf32> to vector<1x64xf32>
    %15 = vector.broadcast %14 : vector<1x64xf32> to vector<16x64xf32>
    %16 = arith.addf %13, %15 : vector<16x64xf32>
    %cst_10 = arith.constant 0.000000e+00 : f32
    %17 = vector.broadcast %cst_10 : f32 to vector<16x64xf32>
    %18 = arith.maximumf %16, %17 : vector<16x64xf32>
    %19 = arith.truncf %18 : vector<16x64xf32> to vector<16x64xbf16>
    %c1 = arith.constant 1 : index
    %c0_11 = arith.constant 0 : index
    %c0_12 = arith.constant 0 : index
    %20 = vector.load %arg3[%c1, %c0_11, %c0_12] : memref<3x64x64xbf16, #tpu.memory_space<vmem>>, vector<1x64x64xbf16>
    %21 = vector.shape_cast %20 : vector<1x64x64xbf16> to vector<64x64xbf16>
    %cst_13 = arith.constant dense<0.000000e+00> : vector<16x64xf32>
    %22 = tpu.matmul %19, %21, %cst_13 {dimension_numbers = #tpu.dot_dimension_numbers<[1], [0], [0], [1], [0, 0, 1, 1], [], []>} : vector<16x64xbf16>, vector<64x64xbf16>, vector<16x64xf32> -> vector<16x64xf32>
    %23 = vector.extract_strided_slice %0 {offsets = [2, 0], sizes = [1, 64], strides = [1, 1]} : vector<4x64xf32> to vector<1x64xf32>
    %24 = vector.broadcast %23 : vector<1x64xf32> to vector<16x64xf32>
    %25 = arith.addf %22, %24 : vector<16x64xf32>
    %cst_14 = arith.constant 0.000000e+00 : f32
    %26 = vector.broadcast %cst_14 : f32 to vector<16x64xf32>
    %27 = arith.maximumf %25, %26 : vector<16x64xf32>
    %28 = arith.truncf %27 : vector<16x64xf32> to vector<16x64xbf16>
    %c2 = arith.constant 2 : index
    %c0_15 = arith.constant 0 : index
    %c0_16 = arith.constant 0 : index
    %29 = vector.load %arg3[%c2, %c0_15, %c0_16] : memref<3x64x64xbf16, #tpu.memory_space<vmem>>, vector<1x64x64xbf16>
    %30 = vector.shape_cast %29 : vector<1x64x64xbf16> to vector<64x64xbf16>
    %cst_17 = arith.constant dense<0.000000e+00> : vector<16x64xf32>
    %31 = tpu.matmul %28, %30, %cst_17 {dimension_numbers = #tpu.dot_dimension_numbers<[1], [0], [0], [1], [0, 0, 1, 1], [], []>} : vector<16x64xbf16>, vector<64x64xbf16>, vector<16x64xf32> -> vector<16x64xf32>
    %32 = vector.extract_strided_slice %0 {offsets = [3, 0], sizes = [1, 64], strides = [1, 1]} : vector<4x64xf32> to vector<1x64xf32>
    %33 = vector.broadcast %32 : vector<1x64xf32> to vector<16x64xf32>
    %34 = arith.addf %31, %33 : vector<16x64xf32>
    %cst_18 = arith.constant 0.000000e+00 : f32
    %35 = vector.broadcast %cst_18 : f32 to vector<16x64xf32>
    %36 = arith.maximumf %34, %35 : vector<16x64xf32>
    %37 = arith.truncf %36 : vector<16x64xf32> to vector<16x64xbf16>
    %c0_19 = arith.constant 0 : index
    %c0_20 = arith.constant 0 : index
    %38 = vector.load %arg4[%c0_19, %c0_20] : memref<64x16xbf16, #tpu.memory_space<vmem>>, vector<64x16xbf16>
    %cst_21 = arith.constant dense<0.000000e+00> : vector<16x16xf32>
    %39 = tpu.matmul %37, %38, %cst_21 {dimension_numbers = #tpu.dot_dimension_numbers<[1], [0], [0], [1], [0, 0, 1, 1], [], []>} : vector<16x64xbf16>, vector<64x16xbf16>, vector<16x16xf32> -> vector<16x16xf32>
    %c0_22 = arith.constant 0 : index
    %c0_23 = arith.constant 0 : index
    %40 = vector.load %arg6[%c0_22, %c0_23] : memref<1x16xf32, #tpu.memory_space<vmem>>, vector<1x16xf32>
    %41 = vector.broadcast %40 : vector<1x16xf32> to vector<16x16xf32>
    %42 = arith.addf %39, %41 : vector<16x16xf32>
    %cst_24 = arith.constant 0.000000e+00 : f32
    %43 = vector.broadcast %cst_24 : f32 to vector<16x16xf32>
    %44 = arith.maximumf %42, %43 : vector<16x16xf32>
    %c0_25 = arith.constant 0 : index
    %c0_26 = arith.constant 0 : index
    %45 = vector.load %arg7[%c0_25, %c0_26] : memref<16x16xf32, #tpu.memory_space<vmem>>, vector<16x16xf32>
    tpu.vector_store %arg7[%c0_25, %c0_26], %44 {strides = array<i32>} : memref<16x16xf32, #tpu.memory_space<vmem>>, vector<16x16xf32>,
    return
  }
  func.func @transform_0(%arg0: i32) -> (i32, i32) {
    %c0_i32 = arith.constant 0 : i32
    %c0_i32_0 = arith.constant 0 : i32
    return %arg0, %c0_i32 : i32, i32
  }
  func.func @transform_1(%arg0: i32) -> (i32, i32) {
    %c0_i32 = arith.constant 0 : i32
    %c0_i32_0 = arith.constant 0 : i32
    %c0_i32_1 = arith.constant 0 : i32
    return %c0_i32, %c0_i32_0 : i32, i32
  }
  func.func @transform_2(%arg0: i32) -> (i32, i32, i32) {
    %c0_i32 = arith.constant 0 : i32
    %c0_i32_0 = arith.constant 0 : i32
    %c0_i32_1 = arith.constant 0 : i32
    %c0_i32_2 = arith.constant 0 : i32
    return %c0_i32, %c0_i32_0, %c0_i32_1 : i32, i32, i32
  }
  func.func @transform_3(%arg0: i32) -> (i32, i32) {
    %c0_i32 = arith.constant 0 : i32
    %c0_i32_0 = arith.constant 0 : i32
    %c0_i32_1 = arith.constant 0 : i32
    return %c0_i32, %c0_i32_0 : i32, i32
  }
  func.func @transform_4(%arg0: i32) -> (i32, i32) {
    %c0_i32 = arith.constant 0 : i32
    %c0_i32_0 = arith.constant 0 : i32
    %c0_i32_1 = arith.constant 0 : i32
    return %c0_i32, %c0_i32_0 : i32, i32
  }
  func.func @transform_5(%arg0: i32) -> (i32, i32) {
    %c0_i32 = arith.constant 0 : i32
    %c0_i32_0 = arith.constant 0 : i32
    %c0_i32_1 = arith.constant 0 : i32
    return %c0_i32, %c0_i32_0 : i32, i32
  }
  func.func @transform_6(%arg0: i32) -> (i32, i32) {
    %c0_i32 = arith.constant 0 : i32
    %c0_i32_0 = arith.constant 0 : i32
    return %arg0, %c0_i32 : i32, i32
  }
}

</mosaic_0001>

<llo_original>
// kernel: tpu_custom_call.1
$region0: #{tpu_custom_call.1}
  #allocation0 [shape = 'u32[]', space=smem, size = 0x4, offset = 0x4, fixed_abs, tag = 'smem constant byte address 0x4 - core index']
  #allocation1 [shape = 'u32[144,128]{1,0:T(1,128)}', space=vmem, size = 0x12000, scoped, tag = 'internal scratch']
  %s0 = inlined_call_operand.vmem [shape: f32[16,125], index: 0, kind: input, shape index: {}]
  %s1 = inlined_call_operand.vmem [shape: bf16[125,64], index: 1, kind: input, shape index: {}]
  %s2 = inlined_call_operand.vmem [shape: bf16[3,64,64], index: 2, kind: input, shape index: {}]
  %s3 = inlined_call_operand.vmem [shape: bf16[64,16], index: 3, kind: input, shape index: {}]
  %s4 = inlined_call_operand.vmem [shape: f32[4,64], index: 4, kind: input, shape index: {}]
  %s5 = inlined_call_operand.vmem [shape: f32[1,16], index: 5, kind: input, shape index: {}]
  %s6 = inlined_call_operand.hbm [shape: f32[16,16], index: 6, kind: output, shape index: {}]
  %s7 = sld [smem:[#allocation0]]
  $region34: #{tpu_custom_call.1} parent=0
    _
  %s9 = ssub.s32 1, %s7
  %s10 = scalar_select 0, %s9, %s7
  $region1: #{tpu_custom_call.1} parent=0
    #allocation2 [shape = 'u8[8192]{0}', space=vmem, size = 0x2000, scoped, tag = 'output window, operand 0, single buffered']
    #allocation3 [shape = 's32[1]{0}', space=sflag, size = 0x4, scoped, tag = 'scoped memory for tpu_custom_call.1']
    %11 = vsyncpa [#allocation3], 0
    // Predicated region
    $region2: #{tpu_custom_call.1} parent=1 // pred_check
      _
    $region3: #{tpu_custom_call.1} parent=1 // pred_check_branch
      %13 = sbr.rel (0) target = $region5
    $region4: #{tpu_custom_call.1} parent=1 // pred_region
      _
    $region5: #{tpu_custom_call.1} parent=1 // pred_fallthru
      _
    // Predicated region
    $region6: #{tpu_custom_call.1} parent=1 // pred_check
      _
    $region7: #{tpu_custom_call.1} parent=1 // pred_check_branch
      %15 = sbr.rel (0) target = $region9
    $region8: #{tpu_custom_call.1} parent=1 // pred_region
      _
    $region9: #{tpu_custom_call.1} parent=1 // pred_fallthru
      _
    // Predicated region
    $region10: #{tpu_custom_call.1} parent=1 // pred_check
      _
    $region11: #{tpu_custom_call.1} parent=1 // pred_check_branch
      %17 = sbr.rel (0) target = $region13
    $region12: #{tpu_custom_call.1} parent=1 // pred_region
      _
    $region13: #{tpu_custom_call.1} parent=1 // pred_fallthru
      _
    // Predicated region
    $region14: #{tpu_custom_call.1} parent=1 // pred_check
      _
    $region15: #{tpu_custom_call.1} parent=1 // pred_check_branch
      %19 = sbr.rel (0) target = $region17
    $region16: #{tpu_custom_call.1} parent=1 // pred_region
      _
    $region17: #{tpu_custom_call.1} parent=1 // pred_fallthru
      _
    // Predicated region
    $region18: #{tpu_custom_call.1} parent=1 // pred_check
      _
    $region19: #{tpu_custom_call.1} parent=1 // pred_check_branch
      %21 = sbr.rel (0) target = $region21
    $region20: #{tpu_custom_call.1} parent=1 // pred_region
      _
    $region21: #{tpu_custom_call.1} parent=1 // pred_fallthru
      _
    // Predicated region
    $region22: #{tpu_custom_call.1} parent=1 // pred_check
      _
    $region23: #{tpu_custom_call.1} parent=1 // pred_check_branch
      %23 = sbr.rel (0) target = $region25
    $region24: #{tpu_custom_call.1} parent=1 // pred_region
      _
    $region25: #{tpu_custom_call.1} parent=1 // pred_fallthru
      _
    %v25 = vld [vmem:[%s4] sm:$0xf]
    %v26 = vld [vmem:[%s0] sm:$0xff]
    %v27 = vld [vmem:[%s0 + $0x8] sm:$0xff]
    %v28 = vpack.c.bf16 %v27, %v26
    %v29 = vld [vmem:[%s1] sm:$0xf]
    %v30 = vld [vmem:[%s1 + $0x4] sm:$0xf]
    %v31 = vld [vmem:[%s1 + $0x8] sm:$0xf]
    %v32 = vld [vmem:[%s1 + $0xc] sm:$0xf]
    %v33 = vld [vmem:[%s1 + $0x10] sm:$0xf]
    %v34 = vld [vmem:[%s1 + $0x14] sm:$0xf]
    %v35 = vld [vmem:[%s1 + $0x18] sm:$0xf]
    %v36 = vld [vmem:[%s1 + $0x1c] sm:$0xf]
    %v37 = vld [vmem:[%s1 + $0x20] sm:$0xf]
    %v38 = vld [vmem:[%s1 + $0x24] sm:$0xf]
    %v39 = vld [vmem:[%s1 + $0x28] sm:$0xf]
    %v40 = vld [vmem:[%s1 + $0x2c] sm:$0xf]
    %v41 = vld [vmem:[%s1 + $0x30] sm:$0xf]
    %v42 = vld [vmem:[%s1 + $0x34] sm:$0xf]
    %v43 = vld [vmem:[%s1 + $0x38] sm:$0xf]
    %v44 = vld [vmem:[%s1 + $0x3c] sm:$0x7]
    %v45 = vlaneseq
    %v46 = vshrl.u32 %v45, 7
    %v47 = vsub.s32 0, %v46
    %v48 = vrot.slane %v25, %v47
    %v65 = vunpack.c.l.b16 %v29
    %v66 = vunpack.c.l.b16 %v30
    %v67 = vunpack.c.l.b16 %v31
    %v68 = vunpack.c.l.b16 %v32
    %v69 = vunpack.c.l.b16 %v33
    %v70 = vunpack.c.l.b16 %v34
    %v71 = vunpack.c.l.b16 %v35
    %v72 = vunpack.c.l.b16 %v36
    %v73 = vunpack.c.l.b16 %v37
    %v74 = vunpack.c.l.b16 %v38
    %v75 = vunpack.c.l.b16 %v39
    %v76 = vunpack.c.l.b16 %v40
    %v77 = vunpack.c.l.b16 %v41
    %v78 = vunpack.c.l.b16 %v42
    %v79 = vunpack.c.l.b16 %v43
    %v80 = vunpack.c.l.b16 %v44
    %v81 = vpack.c.b16 %v66, %v65
    %v82 = vpack.c.b16 %v68, %v67
    %v83 = vpack.c.b16 %v70, %v69
    %v84 = vpack.c.b16 %v72, %v71
    %v85 = vpack.c.b16 %v74, %v73
    %v86 = vpack.c.b16 %v76, %v75
    %v87 = vpack.c.b16 %v78, %v77
    %v88 = vpack.c.b16 %v80, %v79
    %vm96 = vcmask 1022976
    %v98 = vsel %vm96, %v28, 0
    %vm100 = vcmask 1045504
    %vm101 = vcmask 1046528
    %v102 = vsel %vm100, 4294967295, 65535
    %v103 = vsel %vm101, %v102, 0
    %v105 = vand.u32 %v88, %v103
    %107 = vmatprep.subr.bf16.mxu0 0
    %108 = vmatpush1.bf16.msra.mxu0 %v105
    %109 = vmatprep.subr.bf16.mxu0 0
    %110 = vmatpush1.bf16.msra.mxu0 %v87
    %111 = vmatprep.subr.bf16.mxu0 0
    %112 = vmatpush1.bf16.msra.mxu0 %v86
    %113 = vmatprep.subr.bf16.mxu0 0
    %114 = vmatpush1.bf16.msra.mxu0 %v85
    %115 = vmatprep.subr.bf16.mxu0 0
    %116 = vmatpush1.bf16.msra.mxu0 %v84
    %117 = vmatprep.subr.bf16.mxu0 0
    %118 = vmatpush1.bf16.msra.mxu0 %v83
    %119 = vmatprep.subr.bf16.mxu0 0
    %120 = vmatpush1.bf16.msra.mxu0 %v82
    %121 = vmatprep.subr.bf16.mxu0 0
    %122 = vmatpush1.bf16.msra.mxu0 %v81
    %123 = vmatprep.subr.bf16.mxu0 0
    %124 = vmatpush2.bf16.msra.mxu0 0
    %125 = vmatprep.subr.bf16.mxu0 0
    %126 = vmatpush2.bf16.msra.mxu0 0
    %127 = vmatprep.subr.bf16.mxu0 0
    %128 = vmatpush2.bf16.msra.mxu0 0
    %129 = vmatprep.subr.bf16.mxu0 0
    %130 = vmatpush2.bf16.msra.mxu0 0
    %131 = vmatprep.subr.bf16.mxu0 0
    %132 = vmatpush2.bf16.msra.mxu0 0
    %133 = vmatprep.subr.bf16.mxu0 0
    %134 = vmatpush2.bf16.msra.mxu0 0
    %135 = vmatprep.subr.bf16.mxu0 0
    %136 = vmatpush2.bf16.msra.mxu0 0
    %137 = vmatprep.subr.bf16.mxu0 0
    %138 = vmatpush2.bf16.msra.mxu0 0
    %139 = vmatprep.mubr.bf16.mxu0 0
    %140 = vmatmul.mubr.bf16.gmra.mxu0 %v98
    %v141 = vpop.f32.mrf.mxu0
    %v142 = vadd.f32 %v48, %v141
    %v143 = vpop.f32.mrf.mxu0
    %v144 = vpop.f32.mrf.mxu0
    %v145 = vadd.f32 %v48, %v144
    %v146 = vpop.f32.mrf.mxu0
    %147 = vdwg.mxu0
    %v148 = vmax.f32 %v142, 0.0
    %v149 = vmax.f32 %v145, 0.0
    %v150 = vpack.c.bf16 %v149, %v148
    %v151 = vld [vmem:[%s2] sm:$0xf]
    %v152 = vld [vmem:[%s2 + $0x4] sm:$0xf]
    %v153 = vld [vmem:[%s2 + $0x8] sm:$0xf]
    %v154 = vld [vmem:[%s2 + $0xc] sm:$0xf]
    %v155 = vld [vmem:[%s2 + $0x10] sm:$0xf]
    %v156 = vld [vmem:[%s2 + $0x14] sm:$0xf]
    %v157 = vld [vmem:[%s2 + $0x18] sm:$0xf]
    %v158 = vld [vmem:[%s2 + $0x1c] sm:$0xf]
    %v159 = vlaneseq
    %v160 = vshrl.u32 %v159, 7
    %v161 = vsub.s32 1, %v160
    %v162 = vrot.slane %v25, %v161
    %v171 = vunpack.c.l.b16 %v151
    %v172 = vunpack.c.l.b16 %v152
    %v173 = vunpack.c.l.b16 %v153
    %v174 = vunpack.c.l.b16 %v154
    %v175 = vunpack.c.l.b16 %v155
    %v176 = vunpack.c.l.b16 %v156
    %v177 = vunpack.c.l.b16 %v157
    %v178 = vunpack.c.l.b16 %v158
    %v179 = vpack.c.b16 %v172, %v171
    %v180 = vpack.c.b16 %v174, %v173
    %v181 = vpack.c.b16 %v176, %v175
    %v182 = vpack.c.b16 %v178, %v177
    %vm187 = vcmask 523264
    %v189 = vsel %vm187, %v150, 0
    %191 = vmatprep.subr.bf16.mxu0 0
    %192 = vmatpush1.bf16.msra.mxu0 0
    %193 = vmatprep.subr.bf16.mxu0 0
    %194 = vmatpush1.bf16.msra.mxu0 0
    %195 = vmatprep.subr.bf16.mxu0 0
    %196 = vmatpush1.bf16.msra.mxu0 0
    %197 = vmatprep.subr.bf16.mxu0 0
    %198 = vmatpush1.bf16.msra.mxu0 0
    %199 = vmatprep.subr.bf16.mxu0 0
    %200 = vmatpush1.bf16.msra.mxu0 %v182
    %201 = vmatprep.subr.bf16.mxu0 0
    %202 = vmatpush1.bf16.msra.mxu0 %v181
    %203 = vmatprep.subr.bf16.mxu0 0
    %204 = vmatpush1.bf16.msra.mxu0 %v180
    %205 = vmatprep.subr.bf16.mxu0 0
    %206 = vmatpush1.bf16.msra.mxu0 %v179
    %207 = vmatprep.subr.bf16.mxu0 0
    %208 = vmatpush2.bf16.msra.mxu0 0
    %209 = vmatprep.subr.bf16.mxu0 0
    %210 = vmatpush2.bf16.msra.mxu0 0
    %211 = vmatprep.subr.bf16.mxu0 0
    %212 = vmatpush2.bf16.msra.mxu0 0
    %213 = vmatprep.subr.bf16.mxu0 0
    %214 = vmatpush2.bf16.msra.mxu0 0
    %215 = vmatprep.subr.bf16.mxu0 0
    %216 = vmatpush2.bf16.msra.mxu0 0
    %217 = vmatprep.subr.bf16.mxu0 0
    %218 = vmatpush2.bf16.msra.mxu0 0
    %219 = vmatprep.subr.bf16.mxu0 0
    %220 = vmatpush2.bf16.msra.mxu0 0
    %221 = vmatprep.subr.bf16.mxu0 0
    %222 = vmatpush2.bf16.msra.mxu0 0
    %223 = vmatprep.mubr.bf16.mxu0 0
    %224 = vmatmul.mubr.bf16.gmra.mxu0 %v189
    %v225 = vpop.f32.mrf.mxu0
    %v226 = vadd.f32 %v162, %v225
    %v227 = vpop.f32.mrf.mxu0
    %v228 = vpop.f32.mrf.mxu0
    %v229 = vadd.f32 %v162, %v228
    %v230 = vpop.f32.mrf.mxu0
    %231 = vdwg.mxu0
    %v232 = vmax.f32 %v226, 0.0
    %v233 = vmax.f32 %v229, 0.0
    %v234 = vpack.c.bf16 %v233, %v232
    %s235 = scalar_lea.vmem %s2, 32
    %v236 = vld [vmem:[%s235] sm:$0xf]
    %v237 = vld [vmem:[%s235 + $0x4] sm:$0xf]
    %v238 = vld [vmem:[%s235 + $0x8] sm:$0xf]
    %v239 = vld [vmem:[%s235 + $0xc] sm:$0xf]
    %v240 = vld [vmem:[%s235 + $0x10] sm:$0xf]
    %v241 = vld [vmem:[%s235 + $0x14] sm:$0xf]
    %v242 = vld [vmem:[%s235 + $0x18] sm:$0xf]
    %v243 = vld [vmem:[%s235 + $0x1c] sm:$0xf]
    %v244 = vlaneseq
    %v245 = vshrl.u32 %v244, 7
    %v246 = vsub.s32 2, %v245
    %v247 = vrot.slane %v25, %v246
    %v256 = vunpack.c.l.b16 %v236
    %v257 = vunpack.c.l.b16 %v237
    %v258 = vunpack.c.l.b16 %v238
    %v259 = vunpack.c.l.b16 %v239
    %v260 = vunpack.c.l.b16 %v240
    %v261 = vunpack.c.l.b16 %v241
    %v262 = vunpack.c.l.b16 %v242
    %v263 = vunpack.c.l.b16 %v243
    %v264 = vpack.c.b16 %v257, %v256
    %v265 = vpack.c.b16 %v259, %v258
    %v266 = vpack.c.b16 %v261, %v260
    %v267 = vpack.c.b16 %v263, %v262
    %v273 = vsel %vm187, %v234, 0
    %275 = vmatprep.subr.bf16.mxu0 0
    %276 = vmatpush1.bf16.msra.mxu0 0
    %277 = vmatprep.subr.bf16.mxu0 0
    %278 = vmatpush1.bf16.msra.mxu0 0
    %279 = vmatprep.subr.bf16.mxu0 0
    %280 = vmatpush1.bf16.msra.mxu0 0
    %281 = vmatprep.subr.bf16.mxu0 0
    %282 = vmatpush1.bf16.msra.mxu0 0
    %283 = vmatprep.subr.bf16.mxu0 0
    %284 = vmatpush1.bf16.msra.mxu0 %v267
    %285 = vmatprep.subr.bf16.mxu0 0
    %286 = vmatpush1.bf16.msra.mxu0 %v266
    %287 = vmatprep.subr.bf16.mxu0 0
    %288 = vmatpush1.bf16.msra.mxu0 %v265
    %289 = vmatprep.subr.bf16.mxu0 0
    %290 = vmatpush1.bf16.msra.mxu0 %v264
    %291 = vmatprep.subr.bf16.mxu0 0
    %292 = vmatpush2.bf16.msra.mxu0 0
    %293 = vmatprep.subr.bf16.mxu0 0
    %294 = vmatpush2.bf16.msra.mxu0 0
    %295 = vmatprep.subr.bf16.mxu0 0
    %296 = vmatpush2.bf16.msra.mxu0 0
    %297 = vmatprep.subr.bf16.mxu0 0
    %298 = vmatpush2.bf16.msra.mxu0 0
    %299 = vmatprep.subr.bf16.mxu0 0
    %300 = vmatpush2.bf16.msra.mxu0 0
    %301 = vmatprep.subr.bf16.mxu0 0
    %302 = vmatpush2.bf16.msra.mxu0 0
    %303 = vmatprep.subr.bf16.mxu0 0
    %304 = vmatpush2.bf16.msra.mxu0 0
    %305 = vmatprep.subr.bf16.mxu0 0
    %306 = vmatpush2.bf16.msra.mxu0 0
    %307 = vmatprep.mubr.bf16.mxu0 0
    %308 = vmatmul.mubr.bf16.gmra.mxu0 %v273
    %v309 = vpop.f32.mrf.mxu0
    %v310 = vadd.f32 %v247, %v309
    %v311 = vpop.f32.mrf.mxu0
    %v312 = vpop.f32.mrf.mxu0
    %v313 = vadd.f32 %v247, %v312
    %v314 = vpop.f32.mrf.mxu0
    %315 = vdwg.mxu0
    %v316 = vmax.f32 %v310, 0.0
    %v317 = vmax.f32 %v313, 0.0
    %v318 = vpack.c.bf16 %v317, %v316
    %s319 = scalar_lea.vmem %s2, 64
    %v320 = vld [vmem:[%s319] sm:$0xf]
    %v321 = vld [vmem:[%s319 + $0x4] sm:$0xf]
    %v322 = vld [vmem:[%s319 + $0x8] sm:$0xf]
    %v323 = vld [vmem:[%s319 + $0xc] sm:$0xf]
    %v324 = vld [vmem:[%s319 + $0x10] sm:$0xf]
    %v325 = vld [vmem:[%s319 + $0x14] sm:$0xf]
    %v326 = vld [vmem:[%s319 + $0x18] sm:$0xf]
    %v327 = vld [vmem:[%s319 + $0x1c] sm:$0xf]
    %v328 = vlaneseq
    %v329 = vshrl.u32 %v328, 7
    %v330 = vsub.s32 3, %v329
    %v331 = vrot.slane %v25, %v330
    %v340 = vunpack.c.l.b16 %v320
    %v341 = vunpack.c.l.b16 %v321
    %v342 = vunpack.c.l.b16 %v322
    %v343 = vunpack.c.l.b16 %v323
    %v344 = vunpack.c.l.b16 %v324
    %v345 = vunpack.c.l.b16 %v325
    %v346 = vunpack.c.l.b16 %v326
    %v347 = vunpack.c.l.b16 %v327
    %v348 = vpack.c.b16 %v341, %v340
    %v349 = vpack.c.b16 %v343, %v342
    %v350 = vpack.c.b16 %v345, %v344
    %v351 = vpack.c.b16 %v347, %v346
    %v357 = vsel %vm187, %v318, 0
    %359 = vmatprep.subr.bf16.mxu0 0
    %360 = vmatpush1.bf16.msra.mxu0 0
    %361 = vmatprep.subr.bf16.mxu0 0
    %362 = vmatpush1.bf16.msra.mxu0 0
    %363 = vmatprep.subr.bf16.mxu0 0
    %364 = vmatpush1.bf16.msra.mxu0 0
    %365 = vmatprep.subr.bf16.mxu0 0
    %366 = vmatpush1.bf16.msra.mxu0 0
    %367 = vmatprep.subr.bf16.mxu0 0
    %368 = vmatpush1.bf16.msra.mxu0 %v351
    %369 = vmatprep.subr.bf16.mxu0 0
    %370 = vmatpush1.bf16.msra.mxu0 %v350
    %371 = vmatprep.subr.bf16.mxu0 0
    %372 = vmatpush1.bf16.msra.mxu0 %v349
    %373 = vmatprep.subr.bf16.mxu0 0
    %374 = vmatpush1.bf16.msra.mxu0 %v348
    %375 = vmatprep.subr.bf16.mxu0 0
    %376 = vmatpush2.bf16.msra.mxu0 0
    %377 = vmatprep.subr.bf16.mxu0 0
    %378 = vmatpush2.bf16.msra.mxu0 0
    %379 = vmatprep.subr.bf16.mxu0 0
    %380 = vmatpush2.bf16.msra.mxu0 0
    %381 = vmatprep.subr.bf16.mxu0 0
    %382 = vmatpush2.bf16.msra.mxu0 0
    %383 = vmatprep.subr.bf16.mxu0 0
    %384 = vmatpush2.bf16.msra.mxu0 0
    %385 = vmatprep.subr.bf16.mxu0 0
    %386 = vmatpush2.bf16.msra.mxu0 0
    %387 = vmatprep.subr.bf16.mxu0 0
    %388 = vmatpush2.bf16.msra.mxu0 0
    %389 = vmatprep.subr.bf16.mxu0 0
    %390 = vmatpush2.bf16.msra.mxu0 0
    %391 = vmatprep.mubr.bf16.mxu0 0
    %392 = vmatmul.mubr.bf16.gmra.mxu0 %v357
    %v393 = vpop.f32.mrf.mxu0
    %v394 = vadd.f32 %v331, %v393
    %v395 = vpop.f32.mrf.mxu0
    %v396 = vpop.f32.mrf.mxu0
    %v397 = vadd.f32 %v331, %v396
    %v398 = vpop.f32.mrf.mxu0
    %399 = vdwg.mxu0
    %v400 = vmax.f32 %v394, 0.0
    %v401 = vmax.f32 %v397, 0.0
    %v402 = vpack.c.bf16 %v401, %v400
    %v403 = vld [vmem:[%s3] sm:$0xf]
    %v404 = vld [vmem:[%s3 + $0x4] sm:$0xf]
    %v405 = vld [vmem:[%s3 + $0x8] sm:$0xf]
    %v406 = vld [vmem:[%s3 + $0xc] sm:$0xf]
    %v407 = vld [vmem:[%s3 + $0x10] sm:$0xf]
    %v408 = vld [vmem:[%s3 + $0x14] sm:$0xf]
    %v409 = vld [vmem:[%s3 + $0x18] sm:$0xf]
    %v410 = vld [vmem:[%s3 + $0x1c] sm:$0xf]
    %v411 = vld [vmem:[%s5] sm:$0x1]
    %v413 = vlaneseq
    %v414 = vshrl.u32 %v413, 7
    %v415 = vsub.s32 0, %v414
    %v416 = vrot.slane %v411, %v415
    %v426 = vunpack.c.l.b16 %v403
    %v427 = vunpack.c.l.b16 %v404
    %v428 = vunpack.c.l.b16 %v405
    %v429 = vunpack.c.l.b16 %v406
    %v430 = vunpack.c.l.b16 %v407
    %v431 = vunpack.c.l.b16 %v408
    %v432 = vunpack.c.l.b16 %v409
    %v433 = vunpack.c.l.b16 %v410
    %v434 = vpack.c.b16 %v427, %v426
    %v435 = vpack.c.b16 %v429, %v428
    %v436 = vpack.c.b16 %v431, %v430
    %v437 = vpack.c.b16 %v433, %v432
    %v443 = vsel %vm187, %v402, 0
    %445 = vmatprep.subr.bf16.mxu0 0
    %446 = vmatpush1.bf16.msra.mxu0 0
    %447 = vmatprep.subr.bf16.mxu0 0
    %448 = vmatpush1.bf16.msra.mxu0 0
    %449 = vmatprep.subr.bf16.mxu0 0
    %450 = vmatpush1.bf16.msra.mxu0 0
    %451 = vmatprep.subr.bf16.mxu0 0
    %452 = vmatpush1.bf16.msra.mxu0 0
    %453 = vmatprep.subr.bf16.mxu0 0
    %454 = vmatpush1.bf16.msra.mxu0 %v437
    %455 = vmatprep.subr.bf16.mxu0 0
    %456 = vmatpush1.bf16.msra.mxu0 %v436
    %457 = vmatprep.subr.bf16.mxu0 0
    %458 = vmatpush1.bf16.msra.mxu0 %v435
    %459 = vmatprep.subr.bf16.mxu0 0
    %460 = vmatpush1.bf16.msra.mxu0 %v434
    %461 = vmatprep.subr.bf16.mxu0 0
    %462 = vmatpush2.bf16.msra.mxu0 0
    %463 = vmatprep.subr.bf16.mxu0 0
    %464 = vmatpush2.bf16.msra.mxu0 0
    %465 = vmatprep.subr.bf16.mxu0 0
    %466 = vmatpush2.bf16.msra.mxu0 0
    %467 = vmatprep.subr.bf16.mxu0 0
    %468 = vmatpush2.bf16.msra.mxu0 0
    %469 = vmatprep.subr.bf16.mxu0 0
    %470 = vmatpush2.bf16.msra.mxu0 0
    %471 = vmatprep.subr.bf16.mxu0 0
    %472 = vmatpush2.bf16.msra.mxu0 0
    %473 = vmatprep.subr.bf16.mxu0 0
    %474 = vmatpush2.bf16.msra.mxu0 0
    %475 = vmatprep.subr.bf16.mxu0 0
    %476 = vmatpush2.bf16.msra.mxu0 0
    %477 = vmatprep.mubr.bf16.mxu0 0
    %478 = vmatmul.mubr.bf16.gmra.mxu0 %v443
    %v479 = vpop.f32.mrf.mxu0
    %v480 = vadd.f32 %v416, %v479
    %v481 = vpop.f32.mrf.mxu0
    %v482 = vpop.f32.mrf.mxu0
    %v483 = vadd.f32 %v416, %v482
    %v484 = vpop.f32.mrf.mxu0
    %485 = vdwg.mxu0
    %v486 = vmax.f32 %v480, 0.0
    %v487 = vmax.f32 %v483, 0.0
    %vm488 = vcmask 130048
    %489 = vst.msk [vmem:[#allocation2] sm:$0xff] %vm488, %v486
    %490 = vst.msk [vmem:[#allocation2 + $0x8] sm:$0xff] %vm488, %v487
    // Predicated region
    $region26: #{tpu_custom_call.1} parent=1 // pred_check
      _
    $region27: #{tpu_custom_call.1} parent=1 // pred_check_branch
      %492 = sbr.rel (0) target = $region29
    $region28: #{tpu_custom_call.1} parent=1 // pred_region
      %s494 = ssub.s32 256, 256
      %495 = vsyncadd [#allocation3], %s494
      %s496 = sshll.u32 [#allocation2], 4
      %s497 = int_to_ptr.vmem [resolvable:$true] %s496
      %502 = dma.vmem_to_hbm [thread:$0]  %s497, 256, %s6, [#allocation3], 128, 128, 8
    $region29: #{tpu_custom_call.1} parent=1 // pred_fallthru
      _
    // Predicated region
    $region30: #{tpu_custom_call.1} parent=1 // pred_check
      _
    $region31: #{tpu_custom_call.1} parent=1 // pred_check_branch
      %504 = sbr.rel (0) target = $region33
    $region32: #{tpu_custom_call.1} parent=1 // pred_region
      %505 = dma.done [#allocation3], 256
    $region33: #{tpu_custom_call.1} parent=1 // pred_fallthru
      _
    %506 = vsyncpa [#allocation3], 1

</llo_original>
